<compile_context>
chip_gen: v5e
topology: v5e:2x2
jax: 0.10.0
libtpu: 0.0.40
codegen_flags: <defaults>
</compile_context>

<pallas_src>
import jax
import jax.numpy as jnp
from jax.experimental import pallas as pl
from jax.experimental.pallas import tpu as pltpu


def _triangular_kernel(params_ref, x_ref, o_ref):
    # params_ref (SMEM, f32): [a, b, c, 1/(b-a), 1/(c-b)]
    a = params_ref[0]
    b = params_ref[1]
    c = params_ref[2]
    inv_ba = params_ref[3]
    inv_cb = params_ref[4]

    # Load in native dtype, compute in f32 (exact upcast for bf16/f16/f32).
    x = x_ref[...].astype(jnp.float32)

    rising = (a < x) & (x <= b)       # (a, b]: (x - a) * inv_ba
    falling = (b < x) & (x <= c)      # (b, c]: (c - x) * inv_cb

    up = (x - a) * inv_ba
    down = (c - x) * inv_cb

    y = jnp.where(rising, up, jnp.where(falling, down, 0.0))
    o_ref[...] = y.astype(o_ref.dtype)


def _tile_bytes_for_device():
    """Per-tile byte budget, sized to fit the scoped-VMEM default per chip."""
    try:
        kind = jax.devices()[0].device_kind.lower()
    except Exception:  # pragma: no cover - defensive
        return 2 << 20
    if "v6" in kind or "v7" in kind:
        return 4 << 20   # 16 MiB total w/ double-buffered in+out, < 32 MiB default
    return 2 << 20       # v5e/v4/unknown: 8 MiB total, < 16 MiB scoped default


def triangular_memb_func(x, a, b, c, *, max_tile_rows=None):
    """Elementwise triangular membership function (matches the PyTorch forward).

    x: any shape.  a <= b <= c scalars (Python floats or 0-d arrays).
    """
    orig_shape = x.shape
    orig_dtype = x.dtype
    lane = 128

    # Dtypes handled natively by the kernel (cast in-vreg); anything else
    # falls back to a wrapper-side f32 cast.
    native = jnp.dtype(orig_dtype) in (
        jnp.dtype(jnp.float32), jnp.dtype(jnp.bfloat16), jnp.dtype(jnp.float16))

    flat = x.reshape(-1)
    if not native:
        flat = flat.astype(jnp.float32)
    io_dtype = flat.dtype
    n = flat.shape[0]

    # Sublane granularity: 8 rows for 32-bit dtypes, 16 for 16-bit (packing).
    itemsize = jnp.dtype(io_dtype).itemsize
    sub = 8 * (4 // itemsize)

    # Pad only if n is not lane-aligned, and only up to one sublane tile.
    pad = ((-n) % (sub * lane)) if (n % lane) else 0
    if pad:
        flat = jnp.concatenate([flat, jnp.zeros((pad,), dtype=io_dtype)])
    rows = (n + pad) // lane
    x2d = flat.reshape(rows, lane)

    # Tile height: multiple of `sub`, capped by the per-chip byte budget.
    if max_tile_rows is None:
        max_tile_rows = _tile_bytes_for_device() // (lane * itemsize)
    max_tile_rows = max(sub, (max_tile_rows // sub) * sub)

    rows_rounded = -(-rows // sub) * sub
    tile_rows = min(max_tile_rows, rows_rounded)
    # Prefer >= 2 grid steps for mid-size inputs so both v7x TCs get work.
    if tile_rows >= rows_rounded and rows_rounded >= 4 * sub:
        tile_rows = -(-(rows_rounded // 2) // sub) * sub

    grid = (pl.cdiv(rows, tile_rows),)

    # Scalar params + precomputed reciprocals (degenerate a==b / b==c guarded;
    # those branches are never selected by the nested-where anyway).
    a_f = jnp.asarray(a, dtype=jnp.float32)
    b_f = jnp.asarray(b, dtype=jnp.float32)
    c_f = jnp.asarray(c, dtype=jnp.float32)
    inv_ba = jnp.where(b_f > a_f, 1.0 / (b_f - a_f), jnp.float32(0.0))
    inv_cb = jnp.where(c_f > b_f, 1.0 / (c_f - b_f), jnp.float32(0.0))
    params = jnp.stack([a_f, b_f, c_f, inv_ba, inv_cb]).astype(jnp.float32)

    out2d = pl.pallas_call(
        _triangular_kernel,
        out_shape=jax.ShapeDtypeStruct((rows, lane), io_dtype),
        grid_spec=pl.GridSpec(
            grid=grid,
            in_specs=[
                pl.BlockSpec(memory_space=pltpu.SMEM),              # params (5,)
                pl.BlockSpec((tile_rows, lane), lambda i: (i, 0)),  # x tile
            ],
            out_specs=pl.BlockSpec((tile_rows, lane), lambda i: (i, 0)),
        ),
        compiler_params=pltpu.CompilerParams(
            dimension_semantics=("parallel",)),
    )(params, x2d)

    out = out2d.reshape(-1)
    if pad:
        out = out[:n]
    out = out.reshape(orig_shape)
    if not native:
        out = out.astype(orig_dtype)
    return out


def triangular_memb_func_ref(x, a, b, c):
    """Pure-JAX reference matching the PyTorch forward exactly."""
    rising = (a < x) & (x <= b)
    falling = (b < x) & (x <= c)
    return jnp.where(rising, (x - a) / (b - a),
                     jnp.where(falling, (c - x) / (c - b), jnp.zeros_like(x)))


if __name__ == "__main__":
    # Deterministic parameters (module __init__ takes scalars a <= b <= c).
    a, b, c = -0.5, 0.0, 1.0
    key = jax.random.PRNGKey(0)

    # 1) Small NCHW f32 input (lane-aligned: no padding, single block).
    x = jax.random.normal(key, (2, 4, 16, 16), dtype=jnp.float32)
    out = jax.block_until_ready(triangular_memb_func(x, a, b, c))
    ref = triangular_memb_func_ref(x, a, b, c)
    assert out.shape == x.shape and out.dtype == x.dtype
    assert jnp.allclose(out, ref, atol=1e-5, rtol=1e-5), "f32 aligned mismatch"

    # 2) Non-lane-aligned shape (exercises the small-pad + slice path).
    x_odd = jax.random.normal(jax.random.fold_in(key, 1), (3, 5, 7),
                              dtype=jnp.float32)
    out_odd = jax.block_until_ready(triangular_memb_func(x_odd, a, b, c))
    ref_odd = triangular_memb_func_ref(x_odd, a, b, c)
    assert out_odd.shape == x_odd.shape
    assert jnp.allclose(out_odd, ref_odd, atol=1e-5, rtol=1e-5), "odd mismatch"

    # 3) Lane-aligned but multi-block with a partial last block (cdiv grid) —
    #    also validates that tile splitting for >=2 grid steps is correct.
    x_big = jax.random.normal(jax.random.fold_in(key, 2), (1, 136, 128),
                              dtype=jnp.float32)
    out_big = jax.block_until_ready(triangular_memb_func(x_big, a, b, c))
    ref_big = triangular_memb_func_ref(x_big, a, b, c)
    assert jnp.allclose(out_big, ref_big, atol=1e-5, rtol=1e-5), "big mismatch"

    # 4) bf16 input: native dtype through the kernel, f32 compute in-vreg.
    x_bf16 = jax.random.normal(jax.random.fold_in(key, 3), (2, 4, 16, 16),
                               dtype=jnp.float32).astype(jnp.bfloat16)
    out_bf16 = jax.block_until_ready(triangular_memb_func(x_bf16, a, b, c))
    ref_bf16 = triangular_memb_func_ref(
        x_bf16.astype(jnp.float32), a, b, c).astype(jnp.bfloat16)
    assert out_bf16.dtype == jnp.bfloat16
    assert jnp.allclose(out_bf16.astype(jnp.float32),
                        ref_bf16.astype(jnp.float32),
                        atol=1e-2, rtol=1e-2), "bf16 mismatch"

    print("KERNEL_OK")
</pallas_src>

<mosaic_0001>
module attributes {stable_mosaic.version = 11 : i64} {
  func.func @_triangular_kernel(%arg0: i32, %arg1: memref<5xf32, #tpu.memory_space<smem>>, %arg2: memref<16x128xf32, #tpu.memory_space<vmem>>, %arg3: memref<16x128xf32, #tpu.memory_space<vmem>>) attributes {dimension_semantics = [#tpu.dimension_semantics<parallel>], iteration_bounds = array<i64: 1>, scalar_prefetch = 0 : i64, scratch_operands = 0 : i64, tpu.core_type = #tpu.core_type<tc>, window_params = [{transform_indices = @transform_0, window_bounds = array<i64: 5>}, {transform_indices = @transform_1, window_bounds = array<i64: 16, 128>}, {transform_indices = @transform_2, window_bounds = array<i64: 16, 128>}]} {
    %c0 = arith.constant 0 : index
    %0 = memref.load %arg1[%c0] : memref<5xf32, #tpu.memory_space<smem>>
    %c1 = arith.constant 1 : index
    %1 = memref.load %arg1[%c1] : memref<5xf32, #tpu.memory_space<smem>>
    %c2 = arith.constant 2 : index
    %2 = memref.load %arg1[%c2] : memref<5xf32, #tpu.memory_space<smem>>
    %c3 = arith.constant 3 : index
    %3 = memref.load %arg1[%c3] : memref<5xf32, #tpu.memory_space<smem>>
    %c4 = arith.constant 4 : index
    %4 = memref.load %arg1[%c4] : memref<5xf32, #tpu.memory_space<smem>>
    %c0_0 = arith.constant 0 : index
    %c0_1 = arith.constant 0 : index
    %5 = vector.load %arg2[%c0_0, %c0_1] : memref<16x128xf32, #tpu.memory_space<vmem>>, vector<16x128xf32>
    %6 = vector.broadcast %0 : f32 to vector<16x128xf32>
    %7 = arith.cmpf olt, %6, %5 : vector<16x128xf32>
    %8 = vector.broadcast %1 : f32 to vector<16x128xf32>
    %9 = arith.cmpf ole, %5, %8 : vector<16x128xf32>
    %10 = arith.andi %7, %9 : vector<16x128xi1>
    %11 = vector.broadcast %1 : f32 to vector<16x128xf32>
    %12 = arith.cmpf olt, %11, %5 : vector<16x128xf32>
    %13 = vector.broadcast %2 : f32 to vector<16x128xf32>
    %14 = arith.cmpf ole, %5, %13 : vector<16x128xf32>
    %15 = arith.andi %12, %14 : vector<16x128xi1>
    %16 = vector.broadcast %0 : f32 to vector<16x128xf32>
    %17 = arith.subf %5, %16 : vector<16x128xf32>
    %18 = vector.broadcast %3 : f32 to vector<16x128xf32>
    %19 = arith.mulf %17, %18 : vector<16x128xf32>
    %20 = vector.broadcast %2 : f32 to vector<16x128xf32>
    %21 = arith.subf %20, %5 : vector<16x128xf32>
    %22 = vector.broadcast %4 : f32 to vector<16x128xf32>
    %23 = arith.mulf %21, %22 : vector<16x128xf32>
    %cst = arith.constant 0.000000e+00 : f32
    %24 = vector.broadcast %cst : f32 to vector<16x128xf32>
    %25 = arith.select %15, %23, %24 : vector<16x128xi1>, vector<16x128xf32>
    %26 = arith.select %10, %19, %25 : vector<16x128xi1>, vector<16x128xf32>
    %c0_2 = arith.constant 0 : index
    %c0_3 = arith.constant 0 : index
    %27 = vector.load %arg3[%c0_2, %c0_3] : memref<16x128xf32, #tpu.memory_space<vmem>>, vector<16x128xf32>
    tpu.vector_store %arg3[%c0_2, %c0_3], %26 {strides = array<i32>} : memref<16x128xf32, #tpu.memory_space<vmem>>, vector<16x128xf32>,
    return
  }
  func.func @transform_0(%arg0: i32) -> i32 {
    %c0_i32 = arith.constant 0 : i32
    %c0_i32_0 = arith.constant 0 : i32
    return %c0_i32 : i32
  }
  func.func @transform_1(%arg0: i32) -> (i32, i32) {
    %c0_i32 = arith.constant 0 : i32
    %c0_i32_0 = arith.constant 0 : i32
    return %arg0, %c0_i32 : i32, i32
  }
  func.func @transform_2(%arg0: i32) -> (i32, i32) {
    %c0_i32 = arith.constant 0 : i32
    %c0_i32_0 = arith.constant 0 : i32
    return %arg0, %c0_i32 : i32, i32
  }
}

</mosaic_0001>

<llo_original>
// kernel: tpu_custom_call.1
$region0: #{tpu_custom_call.1}
  #allocation0 [shape = 'u32[]', space=smem, size = 0x4, offset = 0x4, fixed_abs, tag = 'smem constant byte address 0x4 - core index']
  #allocation1 [shape = 'u32[72,128]{1,0:T(1,128)}', space=vmem, size = 0x9000, scoped, tag = 'internal scratch']
  %s0 = inlined_call_operand.hbm [shape: f32[5], index: 0, kind: input, shape index: {}]
  %s1 = inlined_call_operand.hbm [shape: f32[16,128], index: 1, kind: input, shape index: {}]
  %s2 = inlined_call_operand.hbm [shape: f32[16,128], index: 2, kind: output, shape index: {}]
  %s3 = sld [smem:[#allocation0]]
  $region26: #{tpu_custom_call.1} parent=0
    _
  %s5 = ssub.s32 1, %s3
  %s6 = scalar_select 0, %s5, %s3
  $region1: #{tpu_custom_call.1} parent=0
    #allocation2 [shape = 'u8[512]{0}', space=smem, size = 0x200, scoped, tag = 'input window, operand 0, single buffered']
    #allocation3 [shape = 's32[1]{0}', space=sflag, size = 0x4, scoped, tag = 'scoped memory for tpu_custom_call.1']
    #allocation4 [shape = 's32[1]{0}', space=sflag, size = 0x4, scoped, tag = 'scoped memory for tpu_custom_call.1']
    #allocation5 [shape = 's32[1]{0}', space=sflag, size = 0x4, scoped, tag = 'scoped memory for tpu_custom_call.1']
    #allocation6 [shape = 'u8[8192]{0}', space=vmem, size = 0x2000, scoped, tag = 'input window, operand 1, single buffered']
    #allocation7 [shape = 'u8[8192]{0}', space=vmem, size = 0x2000, scoped, tag = 'output window, operand 0, single buffered']
    %7 = vsyncpa [#allocation5], 0
    %8 = vsyncpa [#allocation3], 0
    %9 = vsyncpa [#allocation4], 0
    // Predicated region
    $region2: #{tpu_custom_call.1} parent=1 // pred_check
      _
    $region3: #{tpu_custom_call.1} parent=1 // pred_check_branch
      %11 = sbr.rel (0) target = $region5
    $region4: #{tpu_custom_call.1} parent=1 // pred_region
      %13 = vsyncadd [#allocation5], 0
      %s15 = sshll.u32 %s0, 4
      %s16 = int_to_ptr.hbm [resolvable:$true] %s15
      %18 = dma.hbm_to_smem %s16, 16, [#allocation2], [#allocation5]
    $region5: #{tpu_custom_call.1} parent=1 // pred_fallthru
      _
    // Predicated region
    $region6: #{tpu_custom_call.1} parent=1 // pred_check
      _
    $region7: #{tpu_custom_call.1} parent=1 // pred_check_branch
      %20 = sbr.rel (0) target = $region9
    $region8: #{tpu_custom_call.1} parent=1 // pred_region
      %22 = vsyncadd [#allocation3], 0
      %s23 = sshll.u32 %s1, 4
      %s24 = int_to_ptr.hbm [resolvable:$true] %s23
      %s25 = sshll.u32 [#allocation6], 4
      %s26 = int_to_ptr.vmem [resolvable:$true] %s25
      %31 = dma.hbm_to_vmem [thread:$0]  %s24, 256, %s26, [#allocation3], 128, 128, 8
    $region9: #{tpu_custom_call.1} parent=1 // pred_fallthru
      _
    // Predicated region
    $region10: #{tpu_custom_call.1} parent=1 // pred_check
      _
    $region11: #{tpu_custom_call.1} parent=1 // pred_check_branch
      %33 = sbr.rel (0) target = $region13
    $region12: #{tpu_custom_call.1} parent=1 // pred_region
      %35 = dma.done [#allocation5], 16
    $region13: #{tpu_custom_call.1} parent=1 // pred_fallthru
      _
    // Predicated region
    $region14: #{tpu_custom_call.1} parent=1 // pred_check
      _
    $region15: #{tpu_custom_call.1} parent=1 // pred_check_branch
      %37 = sbr.rel (0) target = $region17
    $region16: #{tpu_custom_call.1} parent=1 // pred_region
      %39 = dma.done [#allocation3], 256
    $region17: #{tpu_custom_call.1} parent=1 // pred_fallthru
      _
    %40 = sfence
    %s41 = sld [smem:[#allocation2]]
    %s42 = sld [smem:[#allocation2 + $0x1]]
    %s43 = sld [smem:[#allocation2 + $0x2]]
    %s44 = sld [smem:[#allocation2 + $0x3]]
    %s45 = sld [smem:[#allocation2 + $0x4]]
    %v46 = vld [vmem:[#allocation6] sm:$0xff]
    %v47 = vld [vmem:[#allocation6 + $0x8] sm:$0xff]
    %v48 = vstv %s41
    %vm49 = vcmp.lt.f32.partialorder %v48, %v46
    %vm50 = vcmp.lt.f32.partialorder %v48, %v47
    %v51 = vstv %s42
    %vm52 = vcmp.le.f32.partialorder %v46, %v51
    %vm53 = vcmp.le.f32.partialorder %v47, %v51
    %vm54 = vmand %vm49, %vm52
    %vm55 = vmand %vm50, %vm53
    %vm56 = vcmp.lt.f32.partialorder %v51, %v46
    %vm57 = vcmp.lt.f32.partialorder %v51, %v47
    %v58 = vstv %s43
    %vm59 = vcmp.le.f32.partialorder %v46, %v58
    %vm60 = vcmp.le.f32.partialorder %v47, %v58
    %vm61 = vmand %vm56, %vm59
    %vm62 = vmand %vm57, %vm60
    %v63 = vsub.f32 %v46, %v48
    %v64 = vsub.f32 %v47, %v48
    %v65 = vstv %s44
    %v66 = vmul.f32 %v63, %v65
    %v67 = vmul.f32 %v64, %v65
    %v68 = vsub.f32 %v58, %v46
    %v69 = vsub.f32 %v58, %v47
    %v70 = vstv %s45
    %v71 = vmul.f32 %v68, %v70
    %v72 = vmul.f32 %v69, %v70
    %v73 = vsel %vm61, %v71, 0.0
    %v74 = vsel %vm62, %v72, 0.0
    %v75 = vsel %vm54, %v66, %v73
    %v76 = vsel %vm55, %v67, %v74
    %77 = vst [vmem:[#allocation7] sm:$0xff] %v75
    %78 = vst [vmem:[#allocation7 + $0x8] sm:$0xff] %v76
    // Predicated region
    $region18: #{tpu_custom_call.1} parent=1 // pred_check
      _
    $region19: #{tpu_custom_call.1} parent=1 // pred_check_branch
      %80 = sbr.rel (0) target = $region21
    $region20: #{tpu_custom_call.1} parent=1 // pred_region
      %82 = vsyncadd [#allocation4], 0
      %s83 = sshll.u32 [#allocation7], 4
      %s84 = int_to_ptr.vmem [resolvable:$true] %s83
      %s85 = sshll.u32 %s2, 4
      %s86 = int_to_ptr.hbm [resolvable:$true] %s85
      %91 = dma.vmem_to_hbm [thread:$0]  %s84, 256, %s86, [#allocation4], 128, 128, 8
    $region21: #{tpu_custom_call.1} parent=1 // pred_fallthru
      _
    // Predicated region
    $region22: #{tpu_custom_call.1} parent=1 // pred_check
      _
    $region23: #{tpu_custom_call.1} parent=1 // pred_check_branch
      %93 = sbr.rel (0) target = $region25
    $region24: #{tpu_custom_call.1} parent=1 // pred_region
      %95 = dma.done [#allocation4], 256
    $region25: #{tpu_custom_call.1} parent=1 // pred_fallthru
      _
    %96 = vsyncpa [#allocation3], 1
    %97 = vsyncpa [#allocation4], 1
    %98 = vsyncpa [#allocation5], 1

</llo_original>
